<compile_context>
chip_gen: v5e
topology: v5e:2x2
jax: 0.10.0
libtpu: 0.0.40
codegen_flags: <defaults>
</compile_context>

<pallas_src>
import functools

import jax
import jax.numpy as jnp
from jax import lax
from jax.experimental import pallas as pl
from jax.experimental.pallas import tpu as pltpu


def _round_up(a, m):
    return ((a + m - 1) // m) * m


def _neuralogic_kernel(x_ref, xs_ref, wt_ref, v_ref, widx_ref, out_ref,
                       acc_ref, deg_ref, *, num_weights, reduce_mode,
                       has_weights, tile_n):
    # x_ref   : [tN, Dp]     original node features (for zero in-degree select)
    # xs_ref  : [tE, Dp]     gathered source features x[u] for this edge tile
    # wt_ref  : [K, Dp, Dp]  pre-transposed, padded weights (wt[k] = W[k].T)
    # v_ref   : [1, tE]      int32 destination node ids (-1 for padding)
    # widx_ref: [1, tE]      int32 per-edge weight ids (-1 for padding)
    # acc_ref : [K, tN, Dp]  f32 per-weight gathered source-feature sums
    # deg_ref : [tN, Dp]     f32 in-degree, broadcast over lanes (UDF modes only)
    i = pl.program_id(0)                 # node tile  ('parallel')
    j = pl.program_id(1)                 # edge tile  ('arbitrary', reduction)

    @pl.when(j == 0)
    def _init():
        acc_ref[...] = jnp.zeros_like(acc_ref)
        if reduce_mode != "Sum":
            deg_ref[...] = jnp.zeros_like(deg_ref)

    xs = xs_ref[...]                              # keep input dtype (bf16/f32)
    tile_e = xs.shape[0]
    dot_dtype = xs.dtype

    v_row = v_ref[...]                            # [1, tE] int32
    widx_row = widx_ref[...]                      # [1, tE] int32

    # Destination-incidence mask for this (node-tile, edge-tile), built from raw
    # indices in-kernel.  Out-of-range / padded v (-1) match no node, so bad or
    # padded indices simply drop their messages.
    row_ids = i * tile_n + lax.broadcasted_iota(jnp.int32, (tile_n, tile_e), 0)
    a_bool = row_ids == v_row                     # [tN, tE]
    a_f = a_bool.astype(dot_dtype)                # exact 0/1 in any float dtype

    # One MXU contraction over the edge tile per weight id; per-weight column
    # masking is a [1, tE] sublane-broadcast multiply on top of the shared mask.
    for k in range(num_weights):
        if num_weights == 1:
            ak = a_f                              # padding already masked via v
        else:
            ak = a_f * (widx_row == k).astype(dot_dtype)
        acc_ref[k] = acc_ref[k] + jnp.dot(ak, xs,
                                          preferred_element_type=jnp.float32)

    # In-degree folded into the same reduction (exact counts in f32); only the
    # UDF-reduce activations need it to restore features of isolated nodes.
    if reduce_mode != "Sum":
        deg_ref[...] = deg_ref[...] + jnp.sum(
            a_bool.astype(jnp.float32), axis=1, keepdims=True)

    @pl.when(j == pl.num_programs(1) - 1)
    def _finalize():
        if has_weights:
            # Deferred DxD weight matmuls: once per output tile, not per edge tile.
            total = jnp.zeros(out_ref.shape, jnp.float32)
            for k in range(num_weights):
                total = total + jnp.dot(acc_ref[k],
                                        wt_ref[k].astype(jnp.float32),
                                        preferred_element_type=jnp.float32)
        else:
            total = acc_ref[0]                    # copy_src: no weight matmul
        if reduce_mode == "Sum":
            out = total                           # fn.sum: isolated nodes -> 0
        else:
            if reduce_mode == "Tanh":
                act = jnp.tanh(total)
            elif reduce_mode == "Sigmoid":
                act = jax.nn.sigmoid(total)
            else:                                 # "ReLu"
                act = jnp.maximum(total, 0.0)
            # DGL UDF reduce only runs for nodes with >=1 incoming message:
            # zero in-degree nodes keep their original features.
            out = jnp.where(deg_ref[...] > 0.0, act,
                            x_ref[...].astype(jnp.float32))
        out_ref[...] = out.astype(out_ref.dtype)


def neuralogic_helper_layer(x, u, v, widx, weights, *, activation="Tanh",
                            max_block_n=256, max_block_e=1024):
    """Forward pass of NeuraLogicHelperLayer.

    x       : [N, D] node features
    u, v    : [E] int edge endpoints (source, destination)
    widx    : [E] int per-edge index into `weights` (ignored if weights is None)
    weights : [K, D, D] weight matrices, or None for has_weights=False (copy_src)
    """
    if u.shape[0] == 0:                      # len(layer.u) == 0 -> identity
        return x

    _UDF = ("Sigmoid", "ReLu", "Tanh", "Average", "Maximum")
    reduce_mode = activation if activation in _UDF else "Sum"
    if reduce_mode in ("Average", "Maximum"):
        # TODO(synk): 'Average'/'Maximum' reduce over the feature dim to [N, 1]
        # (shape-changing output); not implemented here.
        raise NotImplementedError(reduce_mode)

    N, D = x.shape
    E = int(u.shape[0])

    has_weights = weights is not None
    if not has_weights:                      # has_weights=False -> fn.copy_src
        widx = jnp.zeros((E,), jnp.int32)
        K = 1
    else:
        K = int(weights.shape[0])
    # TODO(synk): the scalar (shape-(1,)) weight/feature elementwise-multiply
    # branch of message() is not handled; only matrix-weight @ vector-feature.

    # ---- layout plumbing: lane-dense (>=128) feature dim, (8,128)-aligned tiles
    dp = _round_up(D, 128)
    tn = min(_round_up(N, 8), max_block_n)          # node tile   (multiple of 8)
    te = min(_round_up(E, 128), max_block_e)        # edge tile   (multiple of 128)
    n_pad = _round_up(N, tn)
    e_pad = _round_up(E, te)

    dt = x.dtype
    x_p = jnp.zeros((n_pad, dp), dt).at[:N, :D].set(x)
    # TODO(synk): gather x[u] with an in-pipeline DMA gather instead of
    # materializing the [E, Dp] array in HBM.
    xs_p = jnp.zeros((e_pad, dp), dt).at[:E].set(x_p[u])
    if has_weights:
        wt = (jnp.zeros((K, dp, dp), weights.dtype)
              .at[:, :D, :D].set(jnp.transpose(weights, (0, 2, 1))))   # W^T per k
    else:
        wt = jnp.zeros((1, dp, dp), dt)      # unused in-kernel (copy_src path)
    # Raw int32 indices (tiny) instead of dense incidence / one-hot matrices.
    v_p = jnp.full((1, e_pad), -1, jnp.int32).at[0, :E].set(v.astype(jnp.int32))
    widx_p = jnp.full((1, e_pad), -1, jnp.int32).at[0, :E].set(
        widx.astype(jnp.int32))

    kernel = functools.partial(_neuralogic_kernel, num_weights=K,
                               reduce_mode=reduce_mode,
                               has_weights=has_weights, tile_n=tn)

    out = pl.pallas_call(
        kernel,
        out_shape=jax.ShapeDtypeStruct((n_pad, dp), dt),
        grid_spec=pltpu.PrefetchScalarGridSpec(
            num_scalar_prefetch=0,
            grid=(n_pad // tn, e_pad // te),          # (node tiles, edge tiles)
            in_specs=[
                pl.BlockSpec((tn, dp), lambda i, j: (i, 0)),         # x
                pl.BlockSpec((te, dp), lambda i, j: (j, 0)),         # x[u]
                pl.BlockSpec((K, dp, dp), lambda i, j: (0, 0, 0)),   # W^T (resident)
                pl.BlockSpec((1, te), lambda i, j: (0, j)),          # v
                pl.BlockSpec((1, te), lambda i, j: (0, j)),          # widx
            ],
            out_specs=pl.BlockSpec((tn, dp), lambda i, j: (i, 0)),
            scratch_shapes=[
                pltpu.VMEM((K, tn, dp), jnp.float32),   # per-weight source sums
                pltpu.VMEM((tn, dp), jnp.float32),      # in-degree (lane broadcast)
            ],
        ),
        compiler_params=pltpu.CompilerParams(
            dimension_semantics=("parallel", "arbitrary"),
            vmem_limit_bytes=32 * 1024 * 1024,
        ),
    )(x_p, xs_p, wt, v_p, widx_p)

    return out[:N, :D]


def _reference(x, u, v, widx, weights, activation="Tanh"):
    """Pure-JAX f32 reference matching the PyTorch/DGL semantics."""
    N, D = x.shape
    xf = x.astype(jnp.float32)
    wf = weights.astype(jnp.float32)
    msgs = jnp.einsum("edf,ef->ed", wf[widx], xf[u])          # W @ x per edge
    agg = jax.ops.segment_sum(msgs, v, num_segments=N)
    if activation not in ("Sigmoid", "ReLu", "Tanh"):
        return agg
    act = {"Tanh": jnp.tanh, "Sigmoid": jax.nn.sigmoid,
           "ReLu": lambda t: jnp.maximum(t, 0.0)}[activation](agg)
    deg = jax.ops.segment_sum(jnp.ones_like(v, dtype=jnp.float32), v,
                              num_segments=N)
    return jnp.where(deg[:, None] > 0, act, xf)


if __name__ == "__main__":
    key = jax.random.PRNGKey(0)
    k_x, k_w, k_u, k_v, k_wi = jax.random.split(key, 5)

    # Small shapes consistent with the module: neuron_count=16, feature dim 32,
    # 24 edges, 3 shared weight matrices.
    N, D, E, K = 16, 32, 24, 3
    x = jax.random.normal(k_x, (N, D), dtype=jnp.float32)
    weights = 0.1 * jax.random.normal(k_w, (K, D, D), dtype=jnp.float32)
    u = jax.random.randint(k_u, (E,), 0, N)
    v = jax.random.randint(k_v, (E,), 0, N)
    widx = jax.random.randint(k_wi, (E,), 0, K)

    # f32, Tanh (UDF reduce: zero in-degree nodes keep their original x)
    out = jax.block_until_ready(
        neuralogic_helper_layer(x, u, v, widx, weights, activation="Tanh"))
    ref = _reference(x, u, v, widx, weights, "Tanh")
    assert out.shape == (N, D)
    assert jnp.allclose(out, ref, atol=1e-5, rtol=1e-5), "Tanh mismatch"

    # f32, builtin fn.sum reduce (isolated nodes -> 0, no activation)
    out_s = jax.block_until_ready(
        neuralogic_helper_layer(x, u, v, widx, weights, activation="Sum"))
    ref_s = _reference(x, u, v, widx, weights, "Sum")
    assert jnp.allclose(out_s, ref_s, atol=1e-5, rtol=1e-5), "Sum mismatch"

    # has_weights=False (fn.copy_src message) + Sigmoid
    out_c = jax.block_until_ready(
        neuralogic_helper_layer(x, u, v, None, None, activation="Sigmoid"))
    ref_c = _reference(x, u, v, jnp.zeros((E,), jnp.int32),
                       jnp.eye(D, dtype=jnp.float32)[None], "Sigmoid")
    assert jnp.allclose(out_c, ref_c, atol=1e-5, rtol=1e-5), "copy_src mismatch"

    # bf16, multi-tile grid: exercises the E-reduction accumulation across edge
    # tiles and multiple 'parallel' node tiles.
    N2, D2, E2 = 72, 48, 640
    k2 = jax.random.split(key, 4)
    x2 = jax.random.normal(k2[0], (N2, D2)).astype(jnp.bfloat16)
    w2 = (0.1 * jax.random.normal(k2[1], (K, D2, D2))).astype(jnp.bfloat16)
    u2 = jax.random.randint(k2[2], (E2,), 0, N2)
    v2 = jax.random.randint(k2[3], (E2,), 0, N2)
    wi2 = jax.random.randint(k_wi, (E2,), 0, K)
    out2 = jax.block_until_ready(
        neuralogic_helper_layer(x2, u2, v2, wi2, w2, activation="Tanh",
                                max_block_n=32, max_block_e=256))
    ref2 = _reference(x2, u2, v2, wi2, w2, "Tanh")
    assert out2.shape == (N2, D2)
    assert jnp.allclose(out2.astype(jnp.float32), ref2,
                        atol=3e-2, rtol=3e-2), "bf16 mismatch"

    print("KERNEL_OK")
</pallas_src>

<mosaic_0001>
module attributes {stable_mosaic.version = 11 : i64} {
  func.func @_neuralogic_kernel(%arg0: i32, %arg1: i32, %arg2: memref<16x128xf32, #tpu.memory_space<vmem>>, %arg3: memref<128x128xf32, #tpu.memory_space<vmem>>, %arg4: memref<3x128x128xf32, #tpu.memory_space<vmem>>, %arg5: memref<1x128xi32, #tpu.memory_space<vmem>>, %arg6: memref<1x128xi32, #tpu.memory_space<vmem>>, %arg7: memref<16x128xf32, #tpu.memory_space<vmem>>, %arg8: memref<3x16x128xf32, #tpu.memory_space<vmem>>, %arg9: memref<16x128xf32, #tpu.memory_space<vmem>>) attributes {dimension_semantics = [#tpu.dimension_semantics<parallel>, #tpu.dimension_semantics<arbitrary>], iteration_bounds = array<i64: 1, 1>, scalar_prefetch = 0 : i64, scratch_operands = 2 : i64, tpu.core_type = #tpu.core_type<tc>, window_params = [{transform_indices = @transform_0, window_bounds = array<i64: 16, 128>}, {transform_indices = @transform_1, window_bounds = array<i64: 128, 128>}, {pipeline_mode = #tpu.pipeline_mode<synchronous>, transform_indices = @transform_2, window_bounds = array<i64: 3, 128, 128>}, {transform_indices = @transform_3, window_bounds = array<i64: 1, 128>}, {transform_indices = @transform_4, window_bounds = array<i64: 1, 128>}, {transform_indices = @transform_5, window_bounds = array<i64: 16, 128>}]} {
    %c0_i32 = arith.constant 0 : i32
    %0 = arith.cmpi eq, %arg1, %c0_i32 : i32
    %1 = arith.extui %0 : i1 to i32
    %c0_i32_0 = arith.constant 0 : i32
    %2 = arith.cmpi ne, %1, %c0_i32_0 : i32
    scf.if %2 {
      %cst_32 = arith.constant 0.000000e+00 : f32
      %64 = vector.broadcast %cst_32 : f32 to vector<3x16x128xf32>
      %c0_33 = arith.constant 0 : index
      %c0_34 = arith.constant 0 : index
      %c0_35 = arith.constant 0 : index
      %65 = vector.load %arg8[%c0_33, %c0_34, %c0_35] : memref<3x16x128xf32, #tpu.memory_space<vmem>>, vector<3x16x128xf32>
      tpu.vector_store %arg8[%c0_33, %c0_34, %c0_35], %64 {strides = array<i32>} : memref<3x16x128xf32, #tpu.memory_space<vmem>>, vector<3x16x128xf32>,
      %cst_36 = arith.constant 0.000000e+00 : f32
      %66 = vector.broadcast %cst_36 : f32 to vector<16x128xf32>
      %c0_37 = arith.constant 0 : index
      %c0_38 = arith.constant 0 : index
      %67 = vector.load %arg9[%c0_37, %c0_38] : memref<16x128xf32, #tpu.memory_space<vmem>>, vector<16x128xf32>
      tpu.vector_store %arg9[%c0_37, %c0_38], %66 {strides = array<i32>} : memref<16x128xf32, #tpu.memory_space<vmem>>, vector<16x128xf32>,
    } else {
    }
    %c0 = arith.constant 0 : index
    %c0_1 = arith.constant 0 : index
    %3 = vector.load %arg3[%c0, %c0_1] : memref<128x128xf32, #tpu.memory_space<vmem>>, vector<128x128xf32>
    %c0_2 = arith.constant 0 : index
    %c0_3 = arith.constant 0 : index
    %4 = vector.load %arg5[%c0_2, %c0_3] : memref<1x128xi32, #tpu.memory_space<vmem>>, vector<1x128xi32>
    %c0_4 = arith.constant 0 : index
    %c0_5 = arith.constant 0 : index
    %5 = vector.load %arg6[%c0_4, %c0_5] : memref<1x128xi32, #tpu.memory_space<vmem>>, vector<1x128xi32>
    %c16_i32 = arith.constant 16 : i32
    %6 = arith.muli %arg0, %c16_i32 : i32
    %7 = tpu.iota {dimensions = array<i32: 0>} : vector<16x128xi32>
    %8 = vector.broadcast %6 : i32 to vector<16x128xi32>
    %9 = arith.addi %8, %7 : vector<16x128xi32>
    %10 = vector.broadcast %4 : vector<1x128xi32> to vector<16x128xi32>
    %11 = arith.cmpi eq, %9, %10 : vector<16x128xi32>
    %12 = arith.extui %11 : vector<16x128xi1> to vector<16x128xi32>
    %13 = arith.sitofp %12 : vector<16x128xi32> to vector<16x128xf32>
    %c0_i32_6 = arith.constant 0 : i32
    %14 = vector.broadcast %c0_i32_6 : i32 to vector<1x128xi32>
    %15 = arith.cmpi eq, %5, %14 : vector<1x128xi32>
    %16 = arith.extui %15 : vector<1x128xi1> to vector<1x128xi32>
    %17 = arith.sitofp %16 : vector<1x128xi32> to vector<1x128xf32>
    %18 = vector.broadcast %17 : vector<1x128xf32> to vector<16x128xf32>
    %19 = arith.mulf %13, %18 : vector<16x128xf32>
    %c0_7 = arith.constant 0 : index
    %c0_8 = arith.constant 0 : index
    %c0_9 = arith.constant 0 : index
    %20 = vector.load %arg8[%c0_7, %c0_8, %c0_9] : memref<3x16x128xf32, #tpu.memory_space<vmem>>, vector<1x16x128xf32>
    %21 = vector.shape_cast %20 : vector<1x16x128xf32> to vector<16x128xf32>
    %cst = arith.constant dense<0.000000e+00> : vector<16x128xf32>
    %22 = tpu.matmul %19, %3, %cst {dimension_numbers = #tpu.dot_dimension_numbers<[1], [0], [0], [1], [0, 0, 1, 1], [], []>} : vector<16x128xf32>, vector<128x128xf32>, vector<16x128xf32> -> vector<16x128xf32>
    %23 = arith.addf %21, %22 : vector<16x128xf32>
    %c0_10 = arith.constant 0 : index
    %c0_11 = arith.constant 0 : index
    %c0_12 = arith.constant 0 : index
    %24 = vector.load %arg8[%c0_10, %c0_11, %c0_12] : memref<3x16x128xf32, #tpu.memory_space<vmem>>, vector<1x16x128xf32>
    %25 = vector.shape_cast %24 : vector<1x16x128xf32> to vector<16x128xf32>
    %26 = vector.shape_cast %23 : vector<16x128xf32> to vector<1x16x128xf32>
    tpu.vector_store %arg8[%c0_10, %c0_11, %c0_12], %26 {strides = array<i32>} : memref<3x16x128xf32, #tpu.memory_space<vmem>>, vector<1x16x128xf32>,
    %c1_i32 = arith.constant 1 : i32
    %27 = vector.broadcast %c1_i32 : i32 to vector<1x128xi32>
    %28 = arith.cmpi eq, %5, %27 : vector<1x128xi32>
    %29 = arith.extui %28 : vector<1x128xi1> to vector<1x128xi32>
    %30 = arith.sitofp %29 : vector<1x128xi32> to vector<1x128xf32>
    %31 = vector.broadcast %30 : vector<1x128xf32> to vector<16x128xf32>
    %32 = arith.mulf %13, %31 : vector<16x128xf32>
    %c1 = arith.constant 1 : index
    %c0_13 = arith.constant 0 : index
    %c0_14 = arith.constant 0 : index
    %33 = vector.load %arg8[%c1, %c0_13, %c0_14] : memref<3x16x128xf32, #tpu.memory_space<vmem>>, vector<1x16x128xf32>
    %34 = vector.shape_cast %33 : vector<1x16x128xf32> to vector<16x128xf32>
    %cst_15 = arith.constant dense<0.000000e+00> : vector<16x128xf32>
    %35 = tpu.matmul %32, %3, %cst_15 {dimension_numbers = #tpu.dot_dimension_numbers<[1], [0], [0], [1], [0, 0, 1, 1], [], []>} : vector<16x128xf32>, vector<128x128xf32>, vector<16x128xf32> -> vector<16x128xf32>
    %36 = arith.addf %34, %35 : vector<16x128xf32>
    %c1_16 = arith.constant 1 : index
    %c0_17 = arith.constant 0 : index
    %c0_18 = arith.constant 0 : index
    %37 = vector.load %arg8[%c1_16, %c0_17, %c0_18] : memref<3x16x128xf32, #tpu.memory_space<vmem>>, vector<1x16x128xf32>
    %38 = vector.shape_cast %37 : vector<1x16x128xf32> to vector<16x128xf32>
    %39 = vector.shape_cast %36 : vector<16x128xf32> to vector<1x16x128xf32>
    tpu.vector_store %arg8[%c1_16, %c0_17, %c0_18], %39 {strides = array<i32>} : memref<3x16x128xf32, #tpu.memory_space<vmem>>, vector<1x16x128xf32>,
    %c2_i32 = arith.constant 2 : i32
    %40 = vector.broadcast %c2_i32 : i32 to vector<1x128xi32>
    %41 = arith.cmpi eq, %5, %40 : vector<1x128xi32>
    %42 = arith.extui %41 : vector<1x128xi1> to vector<1x128xi32>
    %43 = arith.sitofp %42 : vector<1x128xi32> to vector<1x128xf32>
    %44 = vector.broadcast %43 : vector<1x128xf32> to vector<16x128xf32>
    %45 = arith.mulf %13, %44 : vector<16x128xf32>
    %c2 = arith.constant 2 : index
    %c0_19 = arith.constant 0 : index
    %c0_20 = arith.constant 0 : index
    %46 = vector.load %arg8[%c2, %c0_19, %c0_20] : memref<3x16x128xf32, #tpu.memory_space<vmem>>, vector<1x16x128xf32>
    %47 = vector.shape_cast %46 : vector<1x16x128xf32> to vector<16x128xf32>
    %cst_21 = arith.constant dense<0.000000e+00> : vector<16x128xf32>
    %48 = tpu.matmul %45, %3, %cst_21 {dimension_numbers = #tpu.dot_dimension_numbers<[1], [0], [0], [1], [0, 0, 1, 1], [], []>} : vector<16x128xf32>, vector<128x128xf32>, vector<16x128xf32> -> vector<16x128xf32>
    %49 = arith.addf %47, %48 : vector<16x128xf32>
    %c2_22 = arith.constant 2 : index
    %c0_23 = arith.constant 0 : index
    %c0_24 = arith.constant 0 : index
    %50 = vector.load %arg8[%c2_22, %c0_23, %c0_24] : memref<3x16x128xf32, #tpu.memory_space<vmem>>, vector<1x16x128xf32>
    %51 = vector.shape_cast %50 : vector<1x16x128xf32> to vector<16x128xf32>
    %52 = vector.shape_cast %49 : vector<16x128xf32> to vector<1x16x128xf32>
    tpu.vector_store %arg8[%c2_22, %c0_23, %c0_24], %52 {strides = array<i32>} : memref<3x16x128xf32, #tpu.memory_space<vmem>>, vector<1x16x128xf32>,
    %c0_25 = arith.constant 0 : index
    %c0_26 = arith.constant 0 : index
    %53 = vector.load %arg9[%c0_25, %c0_26] : memref<16x128xf32, #tpu.memory_space<vmem>>, vector<16x128xf32>
    %54 = arith.extui %11 : vector<16x128xi1> to vector<16x128xi32>
    %55 = arith.sitofp %54 : vector<16x128xi32> to vector<16x128xf32>
    %cst_27 = arith.constant dense<0.000000e+00> : vector<16xf32>
    %56 = vector.multi_reduction <add>, %55, %cst_27 [1] : vector<16x128xf32> to vector<16xf32>
    %57 = vector.shape_cast %56 : vector<16xf32> to vector<16x1xf32>
    %58 = vector.broadcast %57 : vector<16x1xf32> to vector<16x128xf32>
    %59 = arith.addf %53, %58 : vector<16x128xf32>
    %c0_28 = arith.constant 0 : index
    %c0_29 = arith.constant 0 : index
    %60 = vector.load %arg9[%c0_28, %c0_29] : memref<16x128xf32, #tpu.memory_space<vmem>>, vector<16x128xf32>
    tpu.vector_store %arg9[%c0_28, %c0_29], %59 {strides = array<i32>} : memref<16x128xf32, #tpu.memory_space<vmem>>, vector<16x128xf32>,
    %c0_i32_30 = arith.constant 0 : i32
    %61 = arith.cmpi eq, %arg1, %c0_i32_30 : i32
    %62 = arith.extui %61 : i1 to i32
    %c0_i32_31 = arith.constant 0 : i32
    %63 = arith.cmpi ne, %62, %c0_i32_31 : i32
    scf.if %63 {
      %cst_32 = arith.constant 0.000000e+00 : f32
      %64 = vector.broadcast %cst_32 : f32 to vector<16x128xf32>
      %c0_33 = arith.constant 0 : index
      %c0_34 = arith.constant 0 : index
      %c0_35 = arith.constant 0 : index
      %65 = vector.load %arg8[%c0_33, %c0_34, %c0_35] : memref<3x16x128xf32, #tpu.memory_space<vmem>>, vector<1x16x128xf32>
      %66 = vector.shape_cast %65 : vector<1x16x128xf32> to vector<16x128xf32>
      %c0_36 = arith.constant 0 : index
      %c0_37 = arith.constant 0 : index
      %c0_38 = arith.constant 0 : index
      %67 = vector.load %arg4[%c0_36, %c0_37, %c0_38] : memref<3x128x128xf32, #tpu.memory_space<vmem>>, vector<1x128x128xf32>
      %68 = vector.shape_cast %67 : vector<1x128x128xf32> to vector<128x128xf32>
      %cst_39 = arith.constant dense<0.000000e+00> : vector<16x128xf32>
      %69 = tpu.matmul %66, %68, %cst_39 {dimension_numbers = #tpu.dot_dimension_numbers<[1], [0], [0], [1], [0, 0, 1, 1], [], []>} : vector<16x128xf32>, vector<128x128xf32>, vector<16x128xf32> -> vector<16x128xf32>
      %70 = arith.addf %64, %69 : vector<16x128xf32>
      %c1_40 = arith.constant 1 : index
      %c0_41 = arith.constant 0 : index
      %c0_42 = arith.constant 0 : index
      %71 = vector.load %arg8[%c1_40, %c0_41, %c0_42] : memref<3x16x128xf32, #tpu.memory_space<vmem>>, vector<1x16x128xf32>
      %72 = vector.shape_cast %71 : vector<1x16x128xf32> to vector<16x128xf32>
      %c1_43 = arith.constant 1 : index
      %c0_44 = arith.constant 0 : index
      %c0_45 = arith.constant 0 : index
      %73 = vector.load %arg4[%c1_43, %c0_44, %c0_45] : memref<3x128x128xf32, #tpu.memory_space<vmem>>, vector<1x128x128xf32>
      %74 = vector.shape_cast %73 : vector<1x128x128xf32> to vector<128x128xf32>
      %cst_46 = arith.constant dense<0.000000e+00> : vector<16x128xf32>
      %75 = tpu.matmul %72, %74, %cst_46 {dimension_numbers = #tpu.dot_dimension_numbers<[1], [0], [0], [1], [0, 0, 1, 1], [], []>} : vector<16x128xf32>, vector<128x128xf32>, vector<16x128xf32> -> vector<16x128xf32>
      %76 = arith.addf %70, %75 : vector<16x128xf32>
      %c2_47 = arith.constant 2 : index
      %c0_48 = arith.constant 0 : index
      %c0_49 = arith.constant 0 : index
      %77 = vector.load %arg8[%c2_47, %c0_48, %c0_49] : memref<3x16x128xf32, #tpu.memory_space<vmem>>, vector<1x16x128xf32>
      %78 = vector.shape_cast %77 : vector<1x16x128xf32> to vector<16x128xf32>
      %c2_50 = arith.constant 2 : index
      %c0_51 = arith.constant 0 : index
      %c0_52 = arith.constant 0 : index
      %79 = vector.load %arg4[%c2_50, %c0_51, %c0_52] : memref<3x128x128xf32, #tpu.memory_space<vmem>>, vector<1x128x128xf32>
      %80 = vector.shape_cast %79 : vector<1x128x128xf32> to vector<128x128xf32>
      %cst_53 = arith.constant dense<0.000000e+00> : vector<16x128xf32>
      %81 = tpu.matmul %78, %80, %cst_53 {dimension_numbers = #tpu.dot_dimension_numbers<[1], [0], [0], [1], [0, 0, 1, 1], [], []>} : vector<16x128xf32>, vector<128x128xf32>, vector<16x128xf32> -> vector<16x128xf32>
      %82 = arith.addf %76, %81 : vector<16x128xf32>
      %83 = math.tanh %82 : vector<16x128xf32>
      %c0_54 = arith.constant 0 : index
      %c0_55 = arith.constant 0 : index
      %84 = vector.load %arg9[%c0_54, %c0_55] : memref<16x128xf32, #tpu.memory_space<vmem>>, vector<16x128xf32>
      %cst_56 = arith.constant 0.000000e+00 : f32
      %85 = vector.broadcast %cst_56 : f32 to vector<16x128xf32>
      %86 = arith.cmpf ogt, %84, %85 : vector<16x128xf32>
      %c0_57 = arith.constant 0 : index
      %c0_58 = arith.constant 0 : index
      %87 = vector.load %arg2[%c0_57, %c0_58] : memref<16x128xf32, #tpu.memory_space<vmem>>, vector<16x128xf32>
      %88 = arith.select %86, %83, %87 : vector<16x128xi1>, vector<16x128xf32>
      %c0_59 = arith.constant 0 : index
      %c0_60 = arith.constant 0 : index
      %89 = vector.load %arg7[%c0_59, %c0_60] : memref<16x128xf32, #tpu.memory_space<vmem>>, vector<16x128xf32>
      tpu.vector_store %arg7[%c0_59, %c0_60], %88 {strides = array<i32>} : memref<16x128xf32, #tpu.memory_space<vmem>>, vector<16x128xf32>,
    } else {
    }
    return
  }
  func.func @transform_0(%arg0: i32, %arg1: i32) -> (i32, i32) {
    %c0_i32 = arith.constant 0 : i32
    %c0_i32_0 = arith.constant 0 : i32
    return %arg0, %c0_i32 : i32, i32
  }
  func.func @transform_1(%arg0: i32, %arg1: i32) -> (i32, i32) {
    %c0_i32 = arith.constant 0 : i32
    %c0_i32_0 = arith.constant 0 : i32
    return %arg1, %c0_i32 : i32, i32
  }
  func.func @transform_2(%arg0: i32, %arg1: i32) -> (i32, i32, i32) {
    %c0_i32 = arith.constant 0 : i32
    %c0_i32_0 = arith.constant 0 : i32
    %c0_i32_1 = arith.constant 0 : i32
    %c0_i32_2 = arith.constant 0 : i32
    return %c0_i32, %c0_i32_0, %c0_i32_1 : i32, i32, i32
  }
  func.func @transform_3(%arg0: i32, %arg1: i32) -> (i32, i32) {
    %c0_i32 = arith.constant 0 : i32
    %c0_i32_0 = arith.constant 0 : i32
    return %c0_i32, %arg1 : i32, i32
  }
  func.func @transform_4(%arg0: i32, %arg1: i32) -> (i32, i32) {
    %c0_i32 = arith.constant 0 : i32
    %c0_i32_0 = arith.constant 0 : i32
    return %c0_i32, %arg1 : i32, i32
  }
  func.func @transform_5(%arg0: i32, %arg1: i32) -> (i32, i32) {
    %c0_i32 = arith.constant 0 : i32
    %c0_i32_0 = arith.constant 0 : i32
    return %arg0, %c0_i32 : i32, i32
  }
}

</mosaic_0001>

<llo_original>
// kernel: tpu_custom_call.1
$region0: #{tpu_custom_call.1}
  #allocation0 [shape = 'u32[]', space=smem, size = 0x4, offset = 0x4, fixed_abs, tag = 'smem constant byte address 0x4 - core index']
  #allocation1 [shape = 'u32[72,128]{1,0:T(1,128)}', space=vmem, size = 0x9000, scoped, tag = 'internal scratch']
  #allocation2 [shape = 'f32[3,16,128]{2,1,0:T(8,128)}', space=vmem, size = 0x6000, scoped, tag = 'scratch operand']
  #allocation3 [shape = 'f32[16,128]{1,0:T(8,128)}', space=vmem, size = 0x2000, scoped, tag = 'scratch operand']
  %s0 = inlined_call_operand.hbm [shape: f32[16,128], index: 0, kind: input, shape index: {}]
  %s1 = inlined_call_operand.hbm [shape: f32[128,128], index: 1, kind: input, shape index: {}]
  %s2 = inlined_call_operand.hbm [shape: f32[3,128,128], index: 2, kind: input, shape index: {}]
  %s3 = inlined_call_operand.vmem [shape: s32[1,128], index: 3, kind: input, shape index: {}]
  %s4 = inlined_call_operand.vmem [shape: s32[1,128], index: 4, kind: input, shape index: {}]
  %s5 = inlined_call_operand.hbm [shape: f32[16,128], index: 5, kind: output, shape index: {}]
  %s6 = sld [smem:[#allocation0]]
  $region50: #{tpu_custom_call.1} parent=0
    _
  %s8 = ssub.s32 1, %s6
  %s9 = scalar_select 0, %s8, %s6
  $region1: #{tpu_custom_call.1} parent=0
    #allocation4 [shape = 'u8[8192]{0}', space=vmem, size = 0x2000, scoped, tag = 'input window, operand 0, single buffered']
    #allocation5 [shape = 's32[1]{0}', space=sflag, size = 0x4, scoped, tag = 'scoped memory for tpu_custom_call.1']
    #allocation6 [shape = 's32[1]{0}', space=sflag, size = 0x4, scoped, tag = 'scoped memory for tpu_custom_call.1']
    #allocation7 [shape = 'u8[65536]{0}', space=vmem, size = 0x10000, scoped, tag = 'input window, operand 1, single buffered']
    #allocation8 [shape = 's32[1]{0}', space=sflag, size = 0x4, scoped, tag = 'scoped memory for tpu_custom_call.1']
    #allocation9 [shape = 'u8[196608]{0}', space=vmem, size = 0x30000, scoped, tag = 'input window, operand 2, single buffered']
    #allocation10 [shape = 'u8[8192]{0}', space=vmem, size = 0x2000, scoped, tag = 'output window, operand 0, single buffered']
    %10 = vsyncpa [#allocation5], 0
    %11 = vsyncpa [#allocation8], 0
    %12 = vsyncpa [#allocation6], 0
    // Predicated region
    $region2: #{tpu_custom_call.1} parent=1 // pred_check
      _
    $region3: #{tpu_custom_call.1} parent=1 // pred_check_branch
      %14 = sbr.rel (0) target = $region5
    $region4: #{tpu_custom_call.1} parent=1 // pred_region
      %16 = vsyncadd [#allocation5], 0
      %s17 = sshll.u32 %s0, 4
      %s18 = int_to_ptr.hbm [resolvable:$true] %s17
      %s19 = sshll.u32 [#allocation4], 4
      %s20 = int_to_ptr.vmem [resolvable:$true] %s19
      %25 = dma.hbm_to_vmem [thread:$0]  %s18, 256, %s20, [#allocation5], 128, 128, 8
    $region5: #{tpu_custom_call.1} parent=1 // pred_fallthru
      _
    // Predicated region
    $region6: #{tpu_custom_call.1} parent=1 // pred_check
      _
    $region7: #{tpu_custom_call.1} parent=1 // pred_check_branch
      %27 = sbr.rel (0) target = $region9
    $region8: #{tpu_custom_call.1} parent=1 // pred_region
      %29 = vsyncadd [#allocation8], 0
      %s30 = sshll.u32 %s1, 4
      %s31 = int_to_ptr.hbm [resolvable:$true] %s30
      %s32 = sshll.u32 [#allocation7], 4
      %s33 = int_to_ptr.vmem [resolvable:$true] %s32
      %38 = dma.hbm_to_vmem [thread:$0]  %s31, 2048, %s33, [#allocation8], 128, 128, 8
    $region9: #{tpu_custom_call.1} parent=1 // pred_fallthru
      _
    // Predicated region
    $region10: #{tpu_custom_call.1} parent=1 // pred_check
      _
    $region11: #{tpu_custom_call.1} parent=1 // pred_check_branch
      %40 = sbr.rel (0) target = $region13
    $region12: #{tpu_custom_call.1} parent=1 // pred_region
      %42 = vsyncadd [#allocation8], 0
      %s43 = sshll.u32 %s2, 4
      %s44 = int_to_ptr.hbm [resolvable:$true] %s43
      %s45 = sshll.u32 [#allocation9], 4
      %s46 = int_to_ptr.vmem [resolvable:$true] %s45
      %51 = dma.hbm_to_vmem [thread:$0]  %s44, 6144, %s46, [#allocation8], 128, 128, 8
    $region13: #{tpu_custom_call.1} parent=1 // pred_fallthru
      _
    // Predicated region
    $region14: #{tpu_custom_call.1} parent=1 // pred_check
      _
    $region15: #{tpu_custom_call.1} parent=1 // pred_check_branch
      %53 = sbr.rel (0) target = $region17
    $region16: #{tpu_custom_call.1} parent=1 // pred_region
      _
    $region17: #{tpu_custom_call.1} parent=1 // pred_fallthru
      _
    // Predicated region
    $region18: #{tpu_custom_call.1} parent=1 // pred_check
      _
    $region19: #{tpu_custom_call.1} parent=1 // pred_check_branch
      %55 = sbr.rel (0) target = $region21
    $region20: #{tpu_custom_call.1} parent=1 // pred_region
      _
    $region21: #{tpu_custom_call.1} parent=1 // pred_fallthru
      _
    // Predicated region
    $region22: #{tpu_custom_call.1} parent=1 // pred_check
      _
    $region23: #{tpu_custom_call.1} parent=1 // pred_check_branch
      %57 = sbr.rel (0) target = $region25
    $region24: #{tpu_custom_call.1} parent=1 // pred_region
      %59 = dma.done [#allocation5], 256
    $region25: #{tpu_custom_call.1} parent=1 // pred_fallthru
      _
    // Predicated region
    $region26: #{tpu_custom_call.1} parent=1 // pred_check
      _
    $region27: #{tpu_custom_call.1} parent=1 // pred_check_branch
      %61 = sbr.rel (0) target = $region29
    $region28: #{tpu_custom_call.1} parent=1 // pred_region
      %63 = dma.done [#allocation8], 2048
    $region29: #{tpu_custom_call.1} parent=1 // pred_fallthru
      _
    // Predicated region
    $region30: #{tpu_custom_call.1} parent=1 // pred_check
      _
    $region31: #{tpu_custom_call.1} parent=1 // pred_check_branch
      %65 = sbr.rel (0) target = $region33
    $region32: #{tpu_custom_call.1} parent=1 // pred_region
      %67 = dma.done [#allocation8], 6144
    $region33: #{tpu_custom_call.1} parent=1 // pred_fallthru
      _
    %p68 = scmp.eq.s32.totalorder 0, 0
    // Predicated region
    $region34: #{tpu_custom_call.1} parent=1 // pred_check
      %p69 = pneg %p68
    $region35: #{tpu_custom_call.1} parent=1 // pred_check_branch
      %71 = sbr.rel (%p69) target = $region37
    $region36: #{tpu_custom_call.1} parent=1 // pred_region
      %72 = vst [vmem:[#allocation2] sm:$0xff] 0.0
      %73 = vst [vmem:[#allocation2 + $0x8] sm:$0xff] 0.0
      %74 = vst [vmem:[#allocation2 + $0x10] sm:$0xff] 0.0
      %75 = vst [vmem:[#allocation2 + $0x18] sm:$0xff] 0.0
      %76 = vst [vmem:[#allocation2 + $0x20] sm:$0xff] 0.0
      %77 = vst [vmem:[#allocation2 + $0x28] sm:$0xff] 0.0
      %78 = vst [vmem:[#allocation3] sm:$0xff] 0.0
      %79 = vst [vmem:[#allocation3 + $0x8] sm:$0xff] 0.0
    $region37: #{tpu_custom_call.1} parent=1 // pred_fallthru
      _
    %v80 = vld [vmem:[#allocation7] sm:$0xff]
    %v81 = vld [vmem:[#allocation7 + $0x8] sm:$0xff]
    %v82 = vld [vmem:[#allocation7 + $0x10] sm:$0xff]
    %v83 = vld [vmem:[#allocation7 + $0x18] sm:$0xff]
    %v84 = vld [vmem:[#allocation7 + $0x20] sm:$0xff]
    %v85 = vld [vmem:[#allocation7 + $0x28] sm:$0xff]
    %v86 = vld [vmem:[#allocation7 + $0x30] sm:$0xff]
    %v87 = vld [vmem:[#allocation7 + $0x38] sm:$0xff]
    %v88 = vld [vmem:[#allocation7 + $0x40] sm:$0xff]
    %v89 = vld [vmem:[#allocation7 + $0x48] sm:$0xff]
    %v90 = vld [vmem:[#allocation7 + $0x50] sm:$0xff]
    %v91 = vld [vmem:[#allocation7 + $0x58] sm:$0xff]
    %v92 = vld [vmem:[#allocation7 + $0x60] sm:$0xff]
    %v93 = vld [vmem:[#allocation7 + $0x68] sm:$0xff]
    %v94 = vld [vmem:[#allocation7 + $0x70] sm:$0xff]
    %v95 = vld [vmem:[#allocation7 + $0x78] sm:$0xff]
    %v96 = vld [vmem:[%s3] sm:$0x1]
    %v97 = vld [vmem:[%s4] sm:$0x1]
    %s98 = smul.u32 0, 16
    %v99 = vlaneseq
    %v100 = vshrl.u32 %v99, 7
    %v101 = vadd.s32 %v100, 8
    %v102 = vstv %s98
    %v103 = vadd.s32 %v102, %v100
    %v104 = vadd.s32 %v102, %v101
    %v105 = vperm.slane %v96, 0
    %vm106 = vcmp.eq.s32.totalorder %v103, %v105
    %vm107 = vcmp.eq.s32.totalorder %v104, %v105
    %v108 = vsel %vm106, 1, 0
    %v109 = vsel %vm107, 1, 0
    %v110 = vcvt.s32.f32 %v108
    %v111 = vcvt.s32.f32 %v109
    %vm112 = vcmp.eq.s32.totalorder %v97, 0
    %v113 = vsel %vm112, 1, 0
    %v114 = vcvt.s32.f32 %v113
    %v116 = vperm.slane %v114, 0
    %v118 = vmul.f32 %v110, %v116
    %v119 = vmul.f32 %v111, %v116
    %v120 = vld [vmem:[#allocation2] sm:$0xff]
    %v121 = vld [vmem:[#allocation2 + $0x8] sm:$0xff]
    %122 = vmatpush.msra.mxu0 %v95
    %123 = vmatpush.msra.mxu0 %v94
    %124 = vmatpush.msra.mxu0 %v93
    %125 = vmatpush.msra.mxu0 %v92
    %126 = vmatpush.msra.mxu0 %v91
    %127 = vmatpush.msra.mxu0 %v90
    %128 = vmatpush.msra.mxu0 %v89
    %129 = vmatpush.msra.mxu0 %v88
    %130 = vmatpush.msra.mxu0 %v87
    %131 = vmatpush.msra.mxu0 %v86
    %132 = vmatpush.msra.mxu0 %v85
    %133 = vmatpush.msra.mxu0 %v84
    %134 = vmatpush.msra.mxu0 %v83
    %135 = vmatpush.msra.mxu0 %v82
    %136 = vmatpush.msra.mxu0 %v81
    %137 = vmatpush.msra.mxu0 %v80
    %138 = vmatmul.f32.gmra.mxu0 %v118
    %v139 = vpop.f32.mrf.mxu0
    %v140 = vadd.f32 0.0, %v139
    %141 = vmatmul.f32.gmra.mxu0 %v119
    %v142 = vpop.f32.mrf.mxu0
    %v143 = vadd.f32 0.0, %v142
    %144 = vdwg.mxu0
    %v145 = vadd.f32 %v120, %v140
    %v146 = vadd.f32 %v121, %v143
    %147 = vst [vmem:[#allocation2] sm:$0xff] %v145
    %148 = vst [vmem:[#allocation2 + $0x8] sm:$0xff] %v146
    %vm149 = vcmp.eq.s32.totalorder %v97, 1
    %v150 = vsel %vm149, 1, 0
    %v151 = vcvt.s32.f32 %v150
    %v153 = vperm.slane %v151, 0
    %v155 = vmul.f32 %v110, %v153
    %v156 = vmul.f32 %v111, %v153
    %s157 = scalar_lea.vmem [#allocation2], 16
    %v158 = vld [vmem:[%s157] sm:$0xff]
    %v159 = vld [vmem:[%s157 + $0x8] sm:$0xff]
    %160 = vmatpush.msra.mxu0 %v95
    %161 = vmatpush.msra.mxu0 %v94
    %162 = vmatpush.msra.mxu0 %v93
    %163 = vmatpush.msra.mxu0 %v92
    %164 = vmatpush.msra.mxu0 %v91
    %165 = vmatpush.msra.mxu0 %v90
    %166 = vmatpush.msra.mxu0 %v89
    %167 = vmatpush.msra.mxu0 %v88
    %168 = vmatpush.msra.mxu0 %v87
    %169 = vmatpush.msra.mxu0 %v86
    %170 = vmatpush.msra.mxu0 %v85
    %171 = vmatpush.msra.mxu0 %v84
    %172 = vmatpush.msra.mxu0 %v83
    %173 = vmatpush.msra.mxu0 %v82
    %174 = vmatpush.msra.mxu0 %v81
    %175 = vmatpush.msra.mxu0 %v80
    %176 = vmatmul.f32.gmra.mxu0 %v155
    %v177 = vpop.f32.mrf.mxu0
    %v178 = vadd.f32 0.0, %v177
    %179 = vmatmul.f32.gmra.mxu0 %v156
    %v180 = vpop.f32.mrf.mxu0
    %v181 = vadd.f32 0.0, %v180
    %182 = vdwg.mxu0
    %v183 = vadd.f32 %v158, %v178
    %v184 = vadd.f32 %v159, %v181
    %185 = vst [vmem:[%s157] sm:$0xff] %v183
    %186 = vst [vmem:[%s157 + $0x8] sm:$0xff] %v184
    %vm187 = vcmp.eq.s32.totalorder %v97, 2
    %v188 = vsel %vm187, 1, 0
    %v189 = vcvt.s32.f32 %v188
    %v191 = vperm.slane %v189, 0
    %v193 = vmul.f32 %v110, %v191
    %v194 = vmul.f32 %v111, %v191
    %s195 = scalar_lea.vmem [#allocation2], 32
    %v196 = vld [vmem:[%s195] sm:$0xff]
    %v197 = vld [vmem:[%s195 + $0x8] sm:$0xff]
    %198 = vmatpush.msra.mxu0 %v95
    %199 = vmatpush.msra.mxu0 %v94
    %200 = vmatpush.msra.mxu0 %v93
    %201 = vmatpush.msra.mxu0 %v92
    %202 = vmatpush.msra.mxu0 %v91
    %203 = vmatpush.msra.mxu0 %v90
    %204 = vmatpush.msra.mxu0 %v89
    %205 = vmatpush.msra.mxu0 %v88
    %206 = vmatpush.msra.mxu0 %v87
    %207 = vmatpush.msra.mxu0 %v86
    %208 = vmatpush.msra.mxu0 %v85
    %209 = vmatpush.msra.mxu0 %v84
    %210 = vmatpush.msra.mxu0 %v83
    %211 = vmatpush.msra.mxu0 %v82
    %212 = vmatpush.msra.mxu0 %v81
    %213 = vmatpush.msra.mxu0 %v80
    %214 = vmatmul.f32.gmra.mxu0 %v193
    %v215 = vpop.f32.mrf.mxu0
    %v216 = vadd.f32 0.0, %v215
    %217 = vmatmul.f32.gmra.mxu0 %v194
    %v218 = vpop.f32.mrf.mxu0
    %v219 = vadd.f32 0.0, %v218
    %220 = vdwg.mxu0
    %v221 = vadd.f32 %v196, %v216
    %v222 = vadd.f32 %v197, %v219
    %223 = vst [vmem:[%s195] sm:$0xff] %v221
    %224 = vst [vmem:[%s195 + $0x8] sm:$0xff] %v222
    %v225 = vld [vmem:[#allocation3] sm:$0xff]
    %v226 = vld [vmem:[#allocation3 + $0x8] sm:$0xff]
    %227 = vadd.xlane.f32.xlu0 %v110
    %v228 = vpop.xlane.xlu0 %227
    %229 = vadd.xlane.f32.xlu0 %v111
    %v230 = vpop.xlane.xlu0 %229
    %v231 = vadd.f32 %v225, %v228
    %v232 = vadd.f32 %v226, %v230
    %233 = vst [vmem:[#allocation3] sm:$0xff] %v231
    %234 = vst [vmem:[#allocation3 + $0x8] sm:$0xff] %v232
    // Predicated region
    $region38: #{tpu_custom_call.1} parent=1 // pred_check
      %p235 = pneg %p68
    $region39: #{tpu_custom_call.1} parent=1 // pred_check_branch
      %237 = sbr.rel (%p235) target = $region41
    $region40: #{tpu_custom_call.1} parent=1 // pred_region
      %v238 = vld [vmem:[#allocation2] sm:$0xff]
      %v239 = vld [vmem:[#allocation2 + $0x8] sm:$0xff]
      %v240 = vld [vmem:[#allocation9] sm:$0xff]
      %v241 = vld [vmem:[#allocation9 + $0x8] sm:$0xff]
      %v242 = vld [vmem:[#allocation9 + $0x10] sm:$0xff]
      %v243 = vld [vmem:[#allocation9 + $0x18] sm:$0xff]
      %v244 = vld [vmem:[#allocation9 + $0x20] sm:$0xff]
      %v245 = vld [vmem:[#allocation9 + $0x28] sm:$0xff]
      %v246 = vld [vmem:[#allocation9 + $0x30] sm:$0xff]
      %v247 = vld [vmem:[#allocation9 + $0x38] sm:$0xff]
      %v248 = vld [vmem:[#allocation9 + $0x40] sm:$0xff]
      %v249 = vld [vmem:[#allocation9 + $0x48] sm:$0xff]
      %v250 = vld [vmem:[#allocation9 + $0x50] sm:$0xff]
      %v251 = vld [vmem:[#allocation9 + $0x58] sm:$0xff]
      %v252 = vld [vmem:[#allocation9 + $0x60] sm:$0xff]
      %v253 = vld [vmem:[#allocation9 + $0x68] sm:$0xff]
      %v254 = vld [vmem:[#allocation9 + $0x70] sm:$0xff]
      %v255 = vld [vmem:[#allocation9 + $0x78] sm:$0xff]
      %v256 = vld [vmem:[%s157] sm:$0xff]
      %v257 = vld [vmem:[%s157 + $0x8] sm:$0xff]
      %s258 = scalar_lea.vmem [#allocation9], 128
      %v259 = vld [vmem:[%s258] sm:$0xff]
      %v260 = vld [vmem:[%s258 + $0x8] sm:$0xff]
      %v261 = vld [vmem:[%s258 + $0x10] sm:$0xff]
      %v262 = vld [vmem:[%s258 + $0x18] sm:$0xff]
      %v263 = vld [vmem:[%s258 + $0x20] sm:$0xff]
      %v264 = vld [vmem:[%s258 + $0x28] sm:$0xff]
      %v265 = vld [vmem:[%s258 + $0x30] sm:$0xff]
      %v266 = vld [vmem:[%s258 + $0x38] sm:$0xff]
      %v267 = vld [vmem:[%s258 + $0x40] sm:$0xff]
      %v268 = vld [vmem:[%s258 + $0x48] sm:$0xff]
      %v269 = vld [vmem:[%s258 + $0x50] sm:$0xff]
      %v270 = vld [vmem:[%s258 + $0x58] sm:$0xff]
      %v271 = vld [vmem:[%s258 + $0x60] sm:$0xff]
      %v272 = vld [vmem:[%s258 + $0x68] sm:$0xff]
      %v273 = vld [vmem:[%s258 + $0x70] sm:$0xff]
      %v274 = vld [vmem:[%s258 + $0x78] sm:$0xff]
      %275 = vmatpush.msra.mxu0 %v274
      %276 = vmatpush.msra.mxu0 %v273
      %277 = vmatpush.msra.mxu0 %v272
      %278 = vmatpush.msra.mxu0 %v271
      %279 = vmatpush.msra.mxu0 %v270
      %280 = vmatpush.msra.mxu0 %v269
      %281 = vmatpush.msra.mxu0 %v268
      %282 = vmatpush.msra.mxu0 %v267
      %283 = vmatpush.msra.mxu0 %v266
      %284 = vmatpush.msra.mxu0 %v265
      %285 = vmatpush.msra.mxu0 %v264
      %286 = vmatpush.msra.mxu0 %v263
      %287 = vmatpush.msra.mxu0 %v262
      %288 = vmatpush.msra.mxu0 %v261
      %289 = vmatpush.msra.mxu0 %v260
      %290 = vmatpush.msra.mxu0 %v259
      %291 = vmatmul.f32.gmra.mxu0 %v256
      %v292 = vpop.f32.mrf.mxu0
      %v293 = vadd.f32 0.0, %v292
      %294 = vmatmul.f32.gmra.mxu0 %v257
      %v295 = vpop.f32.mrf.mxu0
      %v296 = vadd.f32 0.0, %v295
      %297 = vdwg.mxu0
      %298 = vmatpush.msra.mxu0 %v255
      %299 = vmatpush.msra.mxu0 %v254
      %300 = vmatpush.msra.mxu0 %v253
      %301 = vmatpush.msra.mxu0 %v252
      %302 = vmatpush.msra.mxu0 %v251
      %303 = vmatpush.msra.mxu0 %v250
      %304 = vmatpush.msra.mxu0 %v249
      %305 = vmatpush.msra.mxu0 %v248
      %306 = vmatpush.msra.mxu0 %v247
      %307 = vmatpush.msra.mxu0 %v246
      %308 = vmatpush.msra.mxu0 %v245
      %309 = vmatpush.msra.mxu0 %v244
      %310 = vmatpush.msra.mxu0 %v243
      %311 = vmatpush.msra.mxu0 %v242
      %312 = vmatpush.msra.mxu0 %v241
      %313 = vmatpush.msra.mxu0 %v240
      %314 = vmatmul.f32.gmra.mxu0 %v238
      %v315 = vpop.f32.mrf.mxu0
      %v316 = vadd.f32 %v293, %v315
      %317 = vmatmul.f32.gmra.mxu0 %v239
      %v318 = vpop.f32.mrf.mxu0
      %v319 = vadd.f32 %v296, %v318
      %320 = vdwg.mxu0
      %v321 = vld [vmem:[%s195] sm:$0xff]
      %v322 = vld [vmem:[%s195 + $0x8] sm:$0xff]
      %s323 = scalar_lea.vmem [#allocation9], 256
      %v324 = vld [vmem:[%s323] sm:$0xff]
      %v325 = vld [vmem:[%s323 + $0x8] sm:$0xff]
      %v326 = vld [vmem:[%s323 + $0x10] sm:$0xff]
      %v327 = vld [vmem:[%s323 + $0x18] sm:$0xff]
      %v328 = vld [vmem:[%s323 + $0x20] sm:$0xff]
      %v329 = vld [vmem:[%s323 + $0x28] sm:$0xff]
      %v330 = vld [vmem:[%s323 + $0x30] sm:$0xff]
      %v331 = vld [vmem:[%s323 + $0x38] sm:$0xff]
      %v332 = vld [vmem:[%s323 + $0x40] sm:$0xff]
      %v333 = vld [vmem:[%s323 + $0x48] sm:$0xff]
      %v334 = vld [vmem:[%s323 + $0x50] sm:$0xff]
      %v335 = vld [vmem:[%s323 + $0x58] sm:$0xff]
      %v336 = vld [vmem:[%s323 + $0x60] sm:$0xff]
      %v337 = vld [vmem:[%s323 + $0x68] sm:$0xff]
      %v338 = vld [vmem:[%s323 + $0x70] sm:$0xff]
      %v339 = vld [vmem:[%s323 + $0x78] sm:$0xff]
      %340 = vmatpush.msra.mxu0 %v339
      %341 = vmatpush.msra.mxu0 %v338
      %342 = vmatpush.msra.mxu0 %v337
      %343 = vmatpush.msra.mxu0 %v336
      %344 = vmatpush.msra.mxu0 %v335
      %345 = vmatpush.msra.mxu0 %v334
      %346 = vmatpush.msra.mxu0 %v333
      %347 = vmatpush.msra.mxu0 %v332
      %348 = vmatpush.msra.mxu0 %v331
      %349 = vmatpush.msra.mxu0 %v330
      %350 = vmatpush.msra.mxu0 %v329
      %351 = vmatpush.msra.mxu0 %v328
      %352 = vmatpush.msra.mxu0 %v327
      %353 = vmatpush.msra.mxu0 %v326
      %354 = vmatpush.msra.mxu0 %v325
      %355 = vmatpush.msra.mxu0 %v324
      %356 = vmatmul.f32.gmra.mxu0 %v321
      %v357 = vpop.f32.mrf.mxu0
      %v358 = vadd.f32 0.0, %v357
      %359 = vmatmul.f32.gmra.mxu0 %v322
      %v360 = vpop.f32.mrf.mxu0
      %v361 = vadd.f32 0.0, %v360
      %362 = vdwg.mxu0
      %v363 = vadd.f32 %v316, %v358
      %v364 = vadd.f32 %v319, %v361
      %v365 = vtanh.pop %v363
      %v366 = vtanh.pop %v364
      %v367 = vld [vmem:[#allocation3] sm:$0xff]
      %v368 = vld [vmem:[#allocation3 + $0x8] sm:$0xff]
      %vm369 = vcmp.gt.f32.partialorder %v367, 0.0
      %vm370 = vcmp.gt.f32.partialorder %v368, 0.0
      %v371 = vld [vmem:[#allocation4] sm:$0xff]
      %v372 = vld [vmem:[#allocation4 + $0x8] sm:$0xff]
      %v373 = vsel %vm369, %v365, %v371
      %v374 = vsel %vm370, %v366, %v372
      %375 = vst [vmem:[#allocation10] sm:$0xff] %v373
      %376 = vst [vmem:[#allocation10 + $0x8] sm:$0xff] %v374
    $region41: #{tpu_custom_call.1} parent=1 // pred_fallthru
      _
    // Predicated region
    $region42: #{tpu_custom_call.1} parent=1 // pred_check
      _
    $region43: #{tpu_custom_call.1} parent=1 // pred_check_branch
      %378 = sbr.rel (0) target = $region45
    $region44: #{tpu_custom_call.1} parent=1 // pred_region
      %380 = vsyncadd [#allocation6], 0
      %s381 = sshll.u32 [#allocation10], 4
      %s382 = int_to_ptr.vmem [resolvable:$true] %s381
      %s383 = sshll.u32 %s5, 4
      %s384 = int_to_ptr.hbm [resolvable:$true] %s383
      %389 = dma.vmem_to_hbm [thread:$0]  %s382, 256, %s384, [#allocation6], 128, 128, 8
    $region45: #{tpu_custom_call.1} parent=1 // pred_fallthru
      _
    // Predicated region
    $region46: #{tpu_custom_call.1} parent=1 // pred_check
      _
    $region47: #{tpu_custom_call.1} parent=1 // pred_check_branch
      %391 = sbr.rel (0) target = $region49
    $region48: #{tpu_custom_call.1} parent=1 // pred_region
      %393 = dma.done [#allocation6], 256
    $region49: #{tpu_custom_call.1} parent=1 // pred_fallthru
      _
    %394 = vsyncpa [#allocation5], 1
    %395 = vsyncpa [#allocation8], 1
    %396 = vsyncpa [#allocation6], 1

</llo_original>
